<compile_context>
chip_gen: v5e
topology: v5e:2x2
jax: 0.10.0
libtpu: 0.0.40
codegen_flags: <defaults>
</compile_context>

<pallas_src>
import functools

import jax
import jax.numpy as jnp
from jax.experimental import pallas as pl
from jax.experimental.pallas import tpu as pltpu


def _round_up(x, m):
    return ((x + m - 1) // m) * m


def _vmem_capacity_bytes():
    """Per-TensorCore VMEM capacity (generation-aware), with a conservative fallback."""
    try:
        cap = int(pltpu.get_tpu_info().vmem_capacity_bytes)
        if cap > 0:
            return cap
    except Exception:
        pass
    return 64 * 1024 * 1024  # v7x per-core VMEM — smallest current generation


def _choose_tile_n(n, j, itemsize, vmem_bytes, tri_bytes):
    """Rows per batch tile, budgeted against the real lane-padded VMEM footprint:
    double-buffered input blocks, the f32 in-kernel temporaries, the y_true block and the
    (tile_n, 1) accumulator.  Capped at 8192 rows, floored at one sublane group (8)."""
    lane_j = max(_round_up(j, 128), 128)          # lanes the (.., j) blocks occupy in VMEM
    per_row = (
        2 * lane_j * itemsize                     # y_pred block, double-buffered
        + 5 * lane_j * 4                          # f32 temps: logits, e/probs, pred_cdf, true_cdf, diff
        + 2 * 128 * 4                             # y_true (int32, lane-padded), double-buffered
        + 2 * 128 * 4                             # (tile_n, 1) accumulator scratch + per_row temp
    )
    budget = int(vmem_bytes * 0.40) - tri_bytes   # headroom for pipeline bookkeeping
    t = max(budget, 8 * per_row) // per_row
    t = max(8, min(8192, t))
    return (t // 8) * 8


def _emd_kernel(y_pred_ref, y_true_ref, tri_ref, out_ref, acc_ref, *, total_n):
    # y_pred_ref: (TILE_N, J) logits (native dtype)
    # y_true_ref: (TILE_N, 1) int32 class indices
    # tri_ref:    (J, J) upper-triangular ones (f32, or bf16 for large J), grid-resident
    # out_ref:    (1, 1) f32 per-core partial sum (written once, on the last inner step)
    # acc_ref:    (TILE_N, 1) f32 VMEM accumulator, persists across the inner grid axis
    core = pl.program_id(0)
    step = pl.program_id(1)
    steps_per_core = pl.num_programs(1)

    @pl.when(step == 0)
    def _():
        acc_ref[...] = jnp.zeros_like(acc_ref)

    logits = y_pred_ref[...].astype(jnp.float32)
    tn, j = logits.shape

    # softmax over the class (lane) axis; one exact reciprocal per row instead of J divides
    m = jnp.max(logits, axis=1, keepdims=True)
    e = jnp.exp(logits - m)
    sum_e = jnp.sum(e, axis=1, keepdims=True)
    probs = e * pl.reciprocal(sum_e)  # exact (approx=False) to stay within 1e-5 of the reference

    # class-axis cumulative sum on the MXU: pred_cdf = probs @ triu(ones)
    pred_cdf = jnp.dot(probs, tri_ref[...].astype(jnp.float32),
                       preferred_element_type=jnp.float32)

    # cumsum(one_hot(y_true)) is a step function: true_cdf[n, c] = 1 iff c >= y_true[n]
    class_idx = jax.lax.broadcasted_iota(jnp.int32, (tn, j), 1)
    true_cdf = (class_idx >= y_true_ref[...]).astype(jnp.float32)

    diff = pred_cdf - true_cdf
    per_row = jnp.sum(diff * diff, axis=1, keepdims=True)  # (tn, 1)

    # Global row index: rows past the true batch (ragged tail) or belonging to a clamped
    # duplicate tile are discarded with a select, so garbage (incl. NaN) never accumulates
    # and nothing is counted twice.
    row = (core * steps_per_core + step) * tn + jax.lax.broadcasted_iota(jnp.int32, (tn, 1), 0)
    per_row = jnp.where(row < total_n, per_row, 0.0)

    acc_ref[...] += per_row  # vector accumulate; no per-step cross-sublane reduce

    @pl.when(step == steps_per_core - 1)
    def _():
        out_ref[...] = jnp.sum(acc_ref[...], keepdims=True)  # single reduce per core


def emd_loss(y_pred, y_true, num_classes, tile_n=None):
    """y_pred: (N, J) float logits (any float dtype, streamed natively),
    y_true: (N,) int class indices. Returns a scalar f32 mean squared-EMD loss."""
    n, j = y_pred.shape
    assert j == num_classes
    y_true_2d = y_true.astype(jnp.int32).reshape(n, 1)

    # triu entries are exactly 0/1 -> bf16 storage is bit-exact; halves residency for big J
    tri_dtype = jnp.bfloat16 if j >= 256 else jnp.float32
    tri = jnp.triu(jnp.ones((j, j), dtype=tri_dtype))
    tri_bytes = _round_up(j, 8) * _round_up(j, 128) * jnp.dtype(tri_dtype).itemsize

    vmem_bytes = _vmem_capacity_bytes()
    if tile_n is None:
        tile_n = _choose_tile_n(n, j, jnp.dtype(y_pred.dtype).itemsize, vmem_bytes, tri_bytes)
    tile_n = min(tile_n, _round_up(n, 8))
    tile_n = max(8, (tile_n // 8) * 8)

    num_tiles = pl.cdiv(n, tile_n)
    # rebalance rows evenly over the tiles actually run (can only shrink the tile)
    tile_n = min(tile_n, _round_up(pl.cdiv(n, num_tiles), 8))
    num_tiles = pl.cdiv(n, tile_n)

    # Shard the reduction across the two TensorCores (v7x); no-op on 1-TC chips.
    num_cores = 2 if num_tiles >= 2 else 1
    tiles_per_core = pl.cdiv(num_tiles, num_cores)

    def batch_map(c, i):
        # clamp so a core's trailing (duplicate) tile never indexes past the array;
        # the kernel's global-row mask discards its contribution
        return (jnp.minimum(c * tiles_per_core + i, num_tiles - 1), 0)

    kernel = functools.partial(_emd_kernel, total_n=n)
    vmem_limit = int(min(vmem_bytes * 0.7, 100 * 1024 * 1024))

    partial_sums = pl.pallas_call(
        kernel,
        out_shape=jax.ShapeDtypeStruct((num_cores, 1), jnp.float32),
        grid=(num_cores, tiles_per_core),
        in_specs=[
            pl.BlockSpec((tile_n, j), batch_map),        # y_pred, streamed over the batch
            pl.BlockSpec((tile_n, 1), batch_map),        # y_true
            pl.BlockSpec((j, j), lambda c, i: (0, 0)),   # tri, resident across the grid
        ],
        out_specs=pl.BlockSpec((1, 1), lambda c, i: (c, 0)),  # one partial sum per core
        scratch_shapes=[pltpu.VMEM((tile_n, 1), jnp.float32)],
        compiler_params=pltpu.CompilerParams(
            dimension_semantics=("parallel", "arbitrary"),
            vmem_limit_bytes=vmem_limit,
        ),
    )(y_pred, y_true_2d, tri)  # native dtype — no host-side f32 up-cast
    return jnp.sum(partial_sums) / n


def _emd_loss_ref(y_pred, y_true, num_classes):
    # pure-JAX reference mirroring the PyTorch module
    one_hot = jax.nn.one_hot(y_true, num_classes, dtype=jnp.float32)
    probs = jax.nn.softmax(y_pred.astype(jnp.float32), axis=1)
    pred_cdf = jnp.cumsum(probs, axis=1)
    true_cdf = jnp.cumsum(one_hot, axis=1)
    emd = jnp.sum((pred_cdf - true_cdf) ** 2, axis=1)
    return jnp.mean(emd)


if __name__ == "__main__":
    num_classes = 5
    batch = 8

    key = jax.random.PRNGKey(0)
    y_pred = jax.random.normal(key, (batch, num_classes), dtype=jnp.float32)
    y_true = jnp.array([0, 1, 2, 3, 4, 3, 1, 0], dtype=jnp.int32)

    loss = jax.block_until_ready(emd_loss(y_pred, y_true, num_classes))
    ref = _emd_loss_ref(y_pred, y_true, num_classes)
    assert jnp.allclose(loss, ref, atol=1e-5, rtol=1e-5), (loss, ref)

    # native-dtype path: bf16 logits streamed straight through (halved HBM read)
    loss_bf16 = jax.block_until_ready(
        emd_loss(y_pred.astype(jnp.bfloat16), y_true, num_classes)
    )
    ref_bf16 = _emd_loss_ref(
        y_pred.astype(jnp.bfloat16).astype(jnp.float32), y_true, num_classes
    )
    assert jnp.allclose(loss_bf16, ref_bf16, atol=5e-2, rtol=5e-2), (loss_bf16, ref_bf16)

    # ragged batch (N not a multiple of the tile) exercises padded-row masking
    y_pred_r = jax.random.normal(jax.random.PRNGKey(1), (11, num_classes), dtype=jnp.float32)
    y_true_r = jnp.array([0, 1, 2, 3, 4, 3, 1, 0, 2, 4, 1], dtype=jnp.int32)
    loss_r = jax.block_until_ready(emd_loss(y_pred_r, y_true_r, num_classes, tile_n=8))
    ref_r = _emd_loss_ref(y_pred_r, y_true_r, num_classes)
    assert jnp.allclose(loss_r, ref_r, atol=1e-5, rtol=1e-5), (loss_r, ref_r)

    # multi-tile, two-core path with an ODD tile count: exercises the clamped duplicate
    # tile on core 1, the per-core partial-sum outputs, and the vector accumulator
    kp, kt = jax.random.split(jax.random.PRNGKey(2))
    y_pred_m = jax.random.normal(kp, (100, 7), dtype=jnp.float32)
    y_true_m = jax.random.randint(kt, (100,), 0, 7, dtype=jnp.int32)
    loss_m = jax.block_until_ready(emd_loss(y_pred_m, y_true_m, 7, tile_n=24))
    ref_m = _emd_loss_ref(y_pred_m, y_true_m, 7)
    assert jnp.allclose(loss_m, ref_m, atol=1e-4, rtol=1e-4), (loss_m, ref_m)

    print("KERNEL_OK")
</pallas_src>

<mosaic_0001>
module attributes {stable_mosaic.version = 11 : i64} {
  func.func @_emd_kernel(%arg0: i32, %arg1: i32, %arg2: memref<8x5xf32, #tpu.memory_space<vmem>>, %arg3: memref<8x1xi32, #tpu.memory_space<vmem>>, %arg4: memref<5x5xf32, #tpu.memory_space<vmem>>, %arg5: memref<1x1xf32, #tpu.memory_space<vmem>>, %arg6: memref<8x1xf32, #tpu.memory_space<vmem>>) attributes {dimension_semantics = [#tpu.dimension_semantics<parallel>, #tpu.dimension_semantics<arbitrary>], iteration_bounds = array<i64: 1, 1>, scalar_prefetch = 0 : i64, scratch_operands = 1 : i64, tpu.core_type = #tpu.core_type<tc>, window_params = [{transform_indices = @transform_0, window_bounds = array<i64: 8, 5>}, {transform_indices = @transform_1, window_bounds = array<i64: 8, 1>}, {pipeline_mode = #tpu.pipeline_mode<synchronous>, transform_indices = @transform_2, window_bounds = array<i64: 5, 5>}, {transform_indices = @transform_3, window_bounds = array<i64: 1, 1>}]} {
    %c0_i32 = arith.constant 0 : i32
    %0 = arith.cmpi eq, %arg1, %c0_i32 : i32
    %1 = arith.extui %0 : i1 to i32
    %c0_i32_0 = arith.constant 0 : i32
    %2 = arith.cmpi ne, %1, %c0_i32_0 : i32
    scf.if %2 {
      %cst_17 = arith.constant 0.000000e+00 : f32
      %42 = vector.broadcast %cst_17 : f32 to vector<8x1xf32>
      %c0_18 = arith.constant 0 : index
      %c0_19 = arith.constant 0 : index
      %43 = vector.load %arg6[%c0_18, %c0_19] : memref<8x1xf32, #tpu.memory_space<vmem>>, vector<8x1xf32>
      tpu.vector_store %arg6[%c0_18, %c0_19], %42 {strides = array<i32>} : memref<8x1xf32, #tpu.memory_space<vmem>>, vector<8x1xf32>,
    } else {
    }
    %c0 = arith.constant 0 : index
    %c0_1 = arith.constant 0 : index
    %3 = vector.load %arg2[%c0, %c0_1] : memref<8x5xf32, #tpu.memory_space<vmem>>, vector<8x5xf32>
    %cst = arith.constant dense<0xFF800000> : vector<8xf32>
    %4 = vector.multi_reduction <maximumf>, %3, %cst [1] : vector<8x5xf32> to vector<8xf32>
    %5 = vector.shape_cast %4 : vector<8xf32> to vector<8x1xf32>
    %6 = vector.broadcast %5 : vector<8x1xf32> to vector<8x5xf32>
    %7 = arith.subf %3, %6 : vector<8x5xf32>
    %8 = math.exp %7 : vector<8x5xf32>
    %cst_2 = arith.constant dense<0.000000e+00> : vector<8xf32>
    %9 = vector.multi_reduction <add>, %8, %cst_2 [1] : vector<8x5xf32> to vector<8xf32>
    %10 = vector.shape_cast %9 : vector<8xf32> to vector<8x1xf32>
    %11 = tpu.reciprocal %10 : vector<8x1xf32> -> vector<8x1xf32>
    %12 = vector.broadcast %11 : vector<8x1xf32> to vector<8x5xf32>
    %13 = arith.mulf %8, %12 : vector<8x5xf32>
    %c0_3 = arith.constant 0 : index
    %c0_4 = arith.constant 0 : index
    %14 = vector.load %arg4[%c0_3, %c0_4] : memref<5x5xf32, #tpu.memory_space<vmem>>, vector<5x5xf32>
    %cst_5 = arith.constant dense<0.000000e+00> : vector<8x5xf32>
    %15 = tpu.matmul %13, %14, %cst_5 {dimension_numbers = #tpu.dot_dimension_numbers<[1], [0], [0], [1], [0, 0, 1, 1], [], []>} : vector<8x5xf32>, vector<5x5xf32>, vector<8x5xf32> -> vector<8x5xf32>
    %16 = tpu.iota {dimensions = array<i32: 1>} : vector<8x5xi32>
    %c0_6 = arith.constant 0 : index
    %c0_7 = arith.constant 0 : index
    %17 = vector.load %arg3[%c0_6, %c0_7] : memref<8x1xi32, #tpu.memory_space<vmem>>, vector<8x1xi32>
    %18 = vector.broadcast %17 : vector<8x1xi32> to vector<8x5xi32>
    %19 = arith.cmpi sge, %16, %18 : vector<8x5xi32>
    %20 = arith.extui %19 : vector<8x5xi1> to vector<8x5xi32>
    %21 = arith.sitofp %20 : vector<8x5xi32> to vector<8x5xf32>
    %22 = arith.subf %15, %21 : vector<8x5xf32>
    %23 = arith.mulf %22, %22 : vector<8x5xf32>
    %cst_8 = arith.constant dense<0.000000e+00> : vector<8xf32>
    %24 = vector.multi_reduction <add>, %23, %cst_8 [1] : vector<8x5xf32> to vector<8xf32>
    %25 = vector.shape_cast %24 : vector<8xf32> to vector<8x1xf32>
    %c1_i32 = arith.constant 1 : i32
    %26 = arith.muli %arg0, %c1_i32 : i32
    %27 = arith.addi %26, %arg1 : i32
    %c8_i32 = arith.constant 8 : i32
    %28 = arith.muli %27, %c8_i32 : i32
    %29 = tpu.iota {dimensions = array<i32: 0>} : vector<8x1xi32>
    %30 = vector.broadcast %28 : i32 to vector<8x1xi32>
    %31 = arith.addi %30, %29 : vector<8x1xi32>
    %c8_i32_9 = arith.constant 8 : i32
    %32 = vector.broadcast %c8_i32_9 : i32 to vector<8x1xi32>
    %33 = arith.cmpi slt, %31, %32 : vector<8x1xi32>
    %cst_10 = arith.constant 0.000000e+00 : f32
    %34 = vector.broadcast %cst_10 : f32 to vector<8x1xf32>
    %35 = arith.select %33, %25, %34 : vector<8x1xi1>, vector<8x1xf32>
    %c0_11 = arith.constant 0 : index
    %c0_12 = arith.constant 0 : index
    %36 = vector.load %arg6[%c0_11, %c0_12] : memref<8x1xf32, #tpu.memory_space<vmem>>, vector<8x1xf32>
    %37 = arith.addf %36, %35 : vector<8x1xf32>
    %c0_13 = arith.constant 0 : index
    %c0_14 = arith.constant 0 : index
    %38 = vector.load %arg6[%c0_13, %c0_14] : memref<8x1xf32, #tpu.memory_space<vmem>>, vector<8x1xf32>
    tpu.vector_store %arg6[%c0_13, %c0_14], %37 {strides = array<i32>} : memref<8x1xf32, #tpu.memory_space<vmem>>, vector<8x1xf32>,
    %c0_i32_15 = arith.constant 0 : i32
    %39 = arith.cmpi eq, %arg1, %c0_i32_15 : i32
    %40 = arith.extui %39 : i1 to i32
    %c0_i32_16 = arith.constant 0 : i32
    %41 = arith.cmpi ne, %40, %c0_i32_16 : i32
    scf.if %41 {
      %c0_17 = arith.constant 0 : index
      %c0_18 = arith.constant 0 : index
      %42 = vector.load %arg6[%c0_17, %c0_18] : memref<8x1xf32, #tpu.memory_space<vmem>>, vector<8x1xf32>
      %43 = vector.shape_cast %42 : vector<8x1xf32> to vector<1x8x1xf32>
      %cst_19 = arith.constant dense<0.000000e+00> : vector<1xf32>
      %44 = vector.multi_reduction <add>, %43, %cst_19 [1, 2] : vector<1x8x1xf32> to vector<1xf32>
      %45 = vector.shape_cast %44 : vector<1xf32> to vector<1x1x1xf32>
      %46 = vector.extract %45[0, 0, 0] : f32 from vector<1x1x1xf32>
      %47 = vector.broadcast %46 : f32 to vector<1x1xf32>
      %c0_20 = arith.constant 0 : index
      %c0_21 = arith.constant 0 : index
      %48 = vector.load %arg5[%c0_20, %c0_21] : memref<1x1xf32, #tpu.memory_space<vmem>>, vector<1x1xf32>
      tpu.vector_store %arg5[%c0_20, %c0_21], %47 {strides = array<i32>} : memref<1x1xf32, #tpu.memory_space<vmem>>, vector<1x1xf32>,
    } else {
    }
    return
  }
  func.func @transform_0(%arg0: i32, %arg1: i32) -> (i32, i32) {
    %c1_i32 = arith.constant 1 : i32
    %0 = arith.muli %arg0, %c1_i32 : i32
    %1 = arith.addi %0, %arg1 : i32
    %c0_i32 = arith.constant 0 : i32
    %2 = arith.minsi %1, %c0_i32 : i32
    %c0_i32_0 = arith.constant 0 : i32
    %c0_i32_1 = arith.constant 0 : i32
    return %2, %c0_i32_0 : i32, i32
  }
  func.func @transform_1(%arg0: i32, %arg1: i32) -> (i32, i32) {
    %c1_i32 = arith.constant 1 : i32
    %0 = arith.muli %arg0, %c1_i32 : i32
    %1 = arith.addi %0, %arg1 : i32
    %c0_i32 = arith.constant 0 : i32
    %2 = arith.minsi %1, %c0_i32 : i32
    %c0_i32_0 = arith.constant 0 : i32
    %c0_i32_1 = arith.constant 0 : i32
    return %2, %c0_i32_0 : i32, i32
  }
  func.func @transform_2(%arg0: i32, %arg1: i32) -> (i32, i32) {
    %c0_i32 = arith.constant 0 : i32
    %c0_i32_0 = arith.constant 0 : i32
    %c0_i32_1 = arith.constant 0 : i32
    return %c0_i32, %c0_i32_0 : i32, i32
  }
  func.func @transform_3(%arg0: i32, %arg1: i32) -> (i32, i32) {
    %c0_i32 = arith.constant 0 : i32
    %c0_i32_0 = arith.constant 0 : i32
    return %arg0, %c0_i32 : i32, i32
  }
}

</mosaic_0001>

<llo_original>
// kernel: tpu_custom_call.1
$region0: #{tpu_custom_call.1}
  #allocation0 [shape = 'u32[]', space=smem, size = 0x4, offset = 0x4, fixed_abs, tag = 'smem constant byte address 0x4 - core index']
  #allocation1 [shape = 'u32[72,128]{1,0:T(1,128)}', space=vmem, size = 0x9000, scoped, tag = 'internal scratch']
  #allocation2 [shape = 'f32[8,1]{1,0:T(8,128)}', space=vmem, size = 0x1000, scoped, tag = 'scratch operand']
  %s0 = inlined_call_operand.vmem [shape: f32[8,5], index: 0, kind: input, shape index: {}]
  %s1 = inlined_call_operand.vmem [shape: s32[8,1], index: 1, kind: input, shape index: {}]
  %s2 = inlined_call_operand.hbm [shape: f32[5,5], index: 2, kind: input, shape index: {}]
  %s3 = inlined_call_operand.hbm [shape: f32[1,1], index: 3, kind: output, shape index: {}]
  %s4 = sld [smem:[#allocation0]]
  $region34: #{tpu_custom_call.1} parent=0
    _
  %s6 = ssub.s32 1, %s4
  %s7 = scalar_select 0, %s6, %s4
  $region1: #{tpu_custom_call.1} parent=0
    #allocation3 [shape = 'u8[4096]{0}', space=vmem, size = 0x1000, scoped, tag = 'input window, operand 2, single buffered']
    #allocation4 [shape = 's32[1]{0}', space=sflag, size = 0x4, scoped, tag = 'scoped memory for tpu_custom_call.1']
    #allocation5 [shape = 's32[1]{0}', space=sflag, size = 0x4, scoped, tag = 'scoped memory for tpu_custom_call.1']
    #allocation6 [shape = 'u8[512]{0}', space=vmem, size = 0x400, scoped, tag = 'output window, operand 0, single buffered']
    %8 = vsyncpa [#allocation4], 0
    %9 = vsyncpa [#allocation5], 0
    // Predicated region
    $region2: #{tpu_custom_call.1} parent=1 // pred_check
      _
    $region3: #{tpu_custom_call.1} parent=1 // pred_check_branch
      %11 = sbr.rel (0) target = $region5
    $region4: #{tpu_custom_call.1} parent=1 // pred_region
      %s12 = sadd.s32 0, 0
      %p13 = scmp.lt.s32.totalorder %s12, 0
      %s14 = scalar_select %p13, %s12, 0
      %p15 = scmp.lt.s32.totalorder %s14, 0
      %s16 = scalar_select %p15, %s14, 0
      %s17 = smul.addr %s16, 8
      %s18 = scalar_lea.vmem %s0, %s17
      %s19 = sadd.s32 0, 0
      %p20 = scmp.lt.s32.totalorder %s19, 0
      %s21 = scalar_select %p20, %s19, 0
    $region5: #{tpu_custom_call.1} parent=1 // pred_fallthru
      _
    // Predicated region
    $region6: #{tpu_custom_call.1} parent=1 // pred_check
      _
    $region7: #{tpu_custom_call.1} parent=1 // pred_check_branch
      %23 = sbr.rel (0) target = $region9
    $region8: #{tpu_custom_call.1} parent=1 // pred_region
      %s24 = sadd.s32 0, 0
      %p25 = scmp.lt.s32.totalorder %s24, 0
      %s26 = scalar_select %p25, %s24, 0
      %p27 = scmp.lt.s32.totalorder %s26, 0
      %s28 = scalar_select %p27, %s26, 0
      %s29 = smul.addr %s28, 8
      %s30 = scalar_lea.vmem %s1, %s29
      %s31 = sadd.s32 0, 0
      %p32 = scmp.lt.s32.totalorder %s31, 0
      %s33 = scalar_select %p32, %s31, 0
    $region9: #{tpu_custom_call.1} parent=1 // pred_fallthru
      _
    // Predicated region
    $region10: #{tpu_custom_call.1} parent=1 // pred_check
      _
    $region11: #{tpu_custom_call.1} parent=1 // pred_check_branch
      %35 = sbr.rel (0) target = $region13
    $region12: #{tpu_custom_call.1} parent=1 // pred_region
      %37 = vsyncadd [#allocation4], 0
      %s39 = sshll.u32 %s2, 4
      %s40 = int_to_ptr.hbm [resolvable:$true] %s39
      %s41 = sshll.u32 [#allocation3], 4
      %s42 = int_to_ptr.vmem [resolvable:$true] %s41
      %44 = dma.hbm_to_vmem [thread:$0]  %s40, 128, %s42, [#allocation4]
    $region13: #{tpu_custom_call.1} parent=1 // pred_fallthru
      _
    // Predicated region
    $region14: #{tpu_custom_call.1} parent=1 // pred_check
      _
    $region15: #{tpu_custom_call.1} parent=1 // pred_check_branch
      %46 = sbr.rel (0) target = $region17
    $region16: #{tpu_custom_call.1} parent=1 // pred_region
      %48 = dma.done [#allocation4], 128
    $region17: #{tpu_custom_call.1} parent=1 // pred_fallthru
      _
    %s49 = sadd.s32 0, 0
    %p50 = scmp.lt.s32.totalorder %s49, 0
    %s51 = scalar_select %p50, %s49, 0
    %p52 = scmp.lt.s32.totalorder %s51, 0
    %s53 = scalar_select %p52, %s51, 0
    %s54 = smul.addr %s53, 8
    %s55 = scalar_lea.vmem %s0, %s54
    %s56 = sadd.s32 0, 0
    %p57 = scmp.lt.s32.totalorder %s56, 0
    %s58 = scalar_select %p57, %s56, 0
    %p59 = scmp.lt.s32.totalorder %s58, 0
    %s60 = scalar_select %p59, %s58, 0
    %s61 = smul.addr %s60, 8
    %s62 = scalar_lea.vmem %s1, %s61
    %s63 = sadd.s32 0, 0
    %p64 = scmp.lt.s32.totalorder %s63, 0
    %s65 = scalar_select %p64, %s63, 0
    %p66 = scmp.lt.s32.totalorder %s65, 0
    %s67 = scalar_select %p66, %s65, 0
    %s68 = smul.addr %s67, 8
    %s69 = scalar_lea.vmem %s0, %s68
    %s70 = sadd.s32 0, 0
    %p71 = scmp.lt.s32.totalorder %s70, 0
    %s72 = scalar_select %p71, %s70, 0
    %s73 = sadd.s32 0, 0
    %p74 = scmp.lt.s32.totalorder %s73, 0
    %s75 = scalar_select %p74, %s73, 0
    %p76 = scmp.lt.s32.totalorder %s75, 0
    %s77 = scalar_select %p76, %s75, 0
    %s78 = smul.addr %s77, 8
    %s79 = scalar_lea.vmem %s1, %s78
    %s80 = sadd.s32 0, 0
    %p81 = scmp.lt.s32.totalorder %s80, 0
    %s82 = scalar_select %p81, %s80, 0
    %p83 = scmp.eq.s32.totalorder 0, 0
    // Predicated region
    $region18: #{tpu_custom_call.1} parent=1 // pred_check
      %p84 = pneg %p83
    $region19: #{tpu_custom_call.1} parent=1 // pred_check_branch
      %86 = sbr.rel (%p84) target = $region21
    $region20: #{tpu_custom_call.1} parent=1 // pred_region
      %vm87 = vcmask 7168
      %88 = vst.msk [vmem:[#allocation2] sm:$0xff] %vm87, 0.0
    $region21: #{tpu_custom_call.1} parent=1 // pred_fallthru
      _
    %v89 = vld [vmem:[%s69] sm:$0xff]
    %vm90 = vcmask 39936
    %v91 = vsel %vm90, %v89, -inf
    %92 = vmax.xlane.f32.xlu0 %v91
    %v93 = vpop.xlane.xlu0 %92
    %v94 = vsub.f32 %v89, %v93
    %v95 = vmul.f32 %v94, 1.442695
    %v96 = vpow.pop %v95
    %v97 = vsel %vm90, %v96, 0.0
    %98 = vadd.xlane.f32.xlu0 %v97
    %v99 = vpop.xlane.xlu0 %98
    %v100 = vrcp.pop %v99
    %v101 = vmul.f32 %v99, %v100
    %v102 = vsub.f32 1.0, %v101
    %v103 = vmul.f32 %v100, %v102
    %v104 = vadd.f32 %v100, %v103
    %vm105 = vweird.f32 %v99
    %vm106 = vweird.f32 %v100
    %vm107 = vmor %vm105, %vm106
    %v108 = vsel %vm107, %v100, %v104
    %v109 = vand.u32 2147483647, %v99
    %vm110 = vcmp.eq.f32.partialorder %v109, 8.507059e+37
    %v111 = vand.u32 %v99, 2147483648
    %v112 = vor.u32 1.1754944e-38, %v111
    %v113 = vsel %vm110, %v112, %v108
    %v114 = vmul.f32 %v96, %v113
    %v115 = vld [vmem:[#allocation3] sm:$0x1f]
    %v117 = vsel %vm90, %v114, 0
    %vm119 = vcmask 1044480
    %v121 = vsel %vm119, %v115, 0
    %123 = vmatpush.msra.mxu0 0.0
    %124 = vmatpush.msra.mxu0 0.0
    %125 = vmatpush.msra.mxu0 0.0
    %126 = vmatpush.msra.mxu0 0.0
    %127 = vmatpush.msra.mxu0 0.0
    %128 = vmatpush.msra.mxu0 0.0
    %129 = vmatpush.msra.mxu0 0.0
    %130 = vmatpush.msra.mxu0 0.0
    %131 = vmatpush.msra.mxu0 0.0
    %132 = vmatpush.msra.mxu0 0.0
    %133 = vmatpush.msra.mxu0 0.0
    %134 = vmatpush.msra.mxu0 0.0
    %135 = vmatpush.msra.mxu0 0.0
    %136 = vmatpush.msra.mxu0 0.0
    %137 = vmatpush.msra.mxu0 0.0
    %138 = vmatpush.msra.mxu0 %v121
    %139 = vmatmul.f32.gmra.mxu0 %v117
    %v140 = vpop.f32.mrf.mxu0
    %v141 = vadd.f32 0.0, %v140
    %142 = vdwg.mxu0
    %v143 = vlaneseq
    %v144 = vand.u32 %v143, 127
    %v145 = vld [vmem:[%s79] sm:$0xff]
    %146 = vset.pattern.permute.xlu0 0
    %147 = vperm.xlu0 %146, %v145
    %v148 = vpop.permute.xlu0 %147
    %vm149 = vcmp.ge.s32.totalorder %v144, %v148
    %v150 = vsel %vm149, 1, 0
    %v151 = vcvt.s32.f32 %v150
    %v152 = vsub.f32 %v141, %v151
    %v153 = vmul.f32 %v152, %v152
    %v154 = vsel %vm90, %v153, 0.0
    %155 = vadd.xlane.f32.xlu0 %v154
    %v156 = vpop.xlane.xlu0 %155
    %s157 = sadd.s32 0, 0
    %s158 = smul.u32 %s157, 8
    %v159 = vlaneseq
    %v160 = vshrl.u32 %v159, 7
    %v161 = vstv %s158
    %v162 = vadd.s32 %v161, %v160
    %vm163 = vcmp.lt.s32.totalorder %v162, 8
    %v164 = vsel %vm163, %v156, 0.0
    %v165 = vld [vmem:[#allocation2] sm:$0xff]
    %v166 = vadd.f32 %v165, %v164
    %vm167 = vcmask 7168
    %168 = vst.msk [vmem:[#allocation2] sm:$0xff] %vm167, %v166
    // Predicated region
    $region22: #{tpu_custom_call.1} parent=1 // pred_check
      %p169 = pneg %p83
    $region23: #{tpu_custom_call.1} parent=1 // pred_check_branch
      %171 = sbr.rel (%p169) target = $region25
    $region24: #{tpu_custom_call.1} parent=1 // pred_region
      %v172 = vld [vmem:[#allocation2] sm:$0xff]
      %v173 = vsel %vm167, %v172, 0.0
      %174 = vadd.xlane.f32.xlu0 %v173
      %v175 = vpop.xlane.xlu0 %174
      %v176 = vrot.slane %v175, 4
      %v177 = vadd.f32 %v175, %v176
      %v178 = vrot.slane %v177, 2
      %v179 = vadd.f32 %v177, %v178
      %v180 = vrot.slane %v179, 1
      %v181 = vadd.f32 %v179, %v180
      %s182 = vtos %v181
      %v183 = vstv %s182
      %vm184 = vcmask 0
      %185 = vst.msk [vmem:[#allocation6] sm:$0x1] %vm184, %v183
    $region25: #{tpu_custom_call.1} parent=1 // pred_fallthru
      _
    // Predicated region
    $region26: #{tpu_custom_call.1} parent=1 // pred_check
      _
    $region27: #{tpu_custom_call.1} parent=1 // pred_check_branch
      %187 = sbr.rel (0) target = $region29
    $region28: #{tpu_custom_call.1} parent=1 // pred_region
      %189 = vsyncadd [#allocation5], 0
      %s191 = sshll.u32 [#allocation6], 4
      %s192 = int_to_ptr.vmem [resolvable:$true] %s191
      %s193 = sshll.u32 %s3, 4
      %s194 = int_to_ptr.hbm [resolvable:$true] %s193
      %196 = dma.vmem_to_hbm [thread:$0]  %s192, 16, %s194, [#allocation5]
    $region29: #{tpu_custom_call.1} parent=1 // pred_fallthru
      _
    // Predicated region
    $region30: #{tpu_custom_call.1} parent=1 // pred_check
      _
    $region31: #{tpu_custom_call.1} parent=1 // pred_check_branch
      %198 = sbr.rel (0) target = $region33
    $region32: #{tpu_custom_call.1} parent=1 // pred_region
      %200 = dma.done [#allocation5], 16
    $region33: #{tpu_custom_call.1} parent=1 // pred_fallthru
      _
    %201 = vsyncpa [#allocation4], 1
    %202 = vsyncpa [#allocation5], 1

</llo_original>
